<compile_context>
chip_gen: v6e
topology: v6e:2x2x1
jax: 0.10.0
libtpu: 0.0.40
codegen_flags: <defaults>
</compile_context>

<pallas_src>
import functools

import jax
import jax.numpy as jnp
from jax.experimental import pallas as pl
from jax.experimental.pallas import tpu as pltpu


def _round_up(x, m):
    return (x + m - 1) // m * m


def _vmem_capacity_bytes():
    try:
        return int(pltpu.get_tpu_info().vmem_capacity_bytes)
    except Exception:
        return 64 << 20  # conservative fallback (v7x per-core VMEM)


def _tile_vmem_bytes(tm, tf, d_model_p, nk, itemsize, out_itemsize):
    """Rough per-step VMEM footprint (double-buffered BlockSpec pipeline)."""
    return (
        2 * tm * d_model_p * itemsize            # x row tile
        + 2 * tm * d_model_p * out_itemsize      # output tile
        + 2 * d_model_p * tf * itemsize          # W1 chunk
        + 2 * tf * d_model_p * itemsize          # W2 chunk
        + 2 * 8 * tf * 4                         # b1 chunk (sublane-padded)
        + 2 * 8 * d_model_p * 4                  # b2
        + (tm * d_model_p * 4 if nk > 1 else 0)  # f32 accumulator scratch
        + tm * tf * 6                            # hidden h (f32 + cast temp)
    )


def _ffn_kernel_single(x_ref, w1_ref, b1_ref, w2_ref, b2_ref, o_ref):
    # Whole d_ff in one chunk: weights stay resident, no accumulator needed.
    h = jnp.dot(x_ref[...], w1_ref[...], preferred_element_type=jnp.float32)
    h = jnp.maximum(h + b1_ref[...], 0.0)
    # TODO(synk): dropout omitted (eval-mode identity). Training-mode dropout
    # would mask `h` here using pltpu.prng_seed / pltpu.prng_random_bits.
    y = jnp.dot(h.astype(w2_ref.dtype), w2_ref[...],
                preferred_element_type=jnp.float32) + b2_ref[...]
    o_ref[...] = jax.nn.sigmoid(y).astype(o_ref.dtype)


def _ffn_kernel_multi(x_ref, w1_ref, b1_ref, w2_ref, b2_ref, o_ref, acc_ref,
                      *, nk):
    # d_ff split into nk >= 2 chunks along the last (reduction) grid axis.
    k = pl.program_id(1)

    h = jnp.dot(x_ref[...], w1_ref[...], preferred_element_type=jnp.float32)
    h = jnp.maximum(h + b1_ref[...], 0.0)
    # TODO(synk): dropout omitted (eval-mode identity).
    p = jnp.dot(h.astype(w2_ref.dtype), w2_ref[...],
                preferred_element_type=jnp.float32)

    @pl.when(k == 0)
    def _():
        acc_ref[...] = p            # init by overwrite (no zero pass)

    @pl.when((k > 0) & (k < nk - 1))
    def _():
        acc_ref[...] += p

    @pl.when(k == nk - 1)
    def _():
        # Fuse the last partial product with bias + sigmoid: avoids one full
        # tm x d_model_p f32 accumulator store + reload per row tile.
        y = acc_ref[...] + p + b2_ref[...]
        o_ref[...] = jax.nn.sigmoid(y).astype(o_ref.dtype)


@functools.partial(
    jax.jit,
    static_argnames=("d_model", "d_model_p", "d_ff_p", "tf", "tm_pref",
                     "vmem_cap", "compute_dtype"),
)
def _ffn_forward(x, w1p, b1p, w2p, b2p, *, d_model, d_model_p, d_ff_p, tf,
                 tm_pref, vmem_cap, compute_dtype):
    orig_dtype = x.dtype
    batch, seq, _ = x.shape
    M = batch * seq
    nk = d_ff_p // tf
    itemsize = jnp.dtype(compute_dtype).itemsize
    out_itemsize = jnp.dtype(orig_dtype).itemsize
    budget = vmem_cap - (16 << 20)

    # ---- row tile selection (static: shapes are static under jit) ----------
    if M <= tm_pref:
        tm = max(8, _round_up(M, 8))   # don't pad small M up to 128 rows
        if nk == 1 and M >= 512:
            # v7x: give both TensorCores a row tile when weights are resident.
            tm = _round_up((M + 1) // 2, 128)
    else:
        tm = 128
        for cand in (tm_pref, tm_pref // 2, tm_pref // 4, 256, 128):
            if (cand >= 128 and cand % 128 == 0 and
                    _tile_vmem_bytes(cand, tf, d_model_p, nk, itemsize,
                                     out_itemsize) <= budget):
                tm = cand
                break
    M_p = _round_up(M, tm)
    grid = (M_p // tm, nk)

    # ---- per-call activation prep (weights were prepared once at init) -----
    x2d = x.reshape(M, d_model).astype(compute_dtype)
    xp = jnp.pad(x2d, ((0, M_p - M), (0, d_model_p - d_model)))

    vmem_use = _tile_vmem_bytes(tm, tf, d_model_p, nk, itemsize, out_itemsize)
    vmem_limit = int(min(vmem_cap - (8 << 20),           # respect v7x 64 MiB
                         max(32 << 20, vmem_use * 1.2 + (4 << 20))))

    weight_passes = 1 if nk == 1 else (M_p // tm)         # re-streaming count
    cost = pl.CostEstimate(
        flops=4 * M_p * d_model_p * d_ff_p,               # two matmuls
        transcendentals=M_p * d_model_p,                  # sigmoid
        bytes_accessed=(xp.size * itemsize
                        + M_p * d_model_p * out_itemsize
                        + weight_passes * (w1p.size + w2p.size) * itemsize
                        + (b1p.size + b2p.size) * 4),
    )

    if nk == 1:
        kernel = _ffn_kernel_single
        scratch_shapes = []
    else:
        kernel = functools.partial(_ffn_kernel_multi, nk=nk)
        scratch_shapes = [pltpu.VMEM((tm, d_model_p), jnp.float32)]

    out_p = pl.pallas_call(
        kernel,
        out_shape=jax.ShapeDtypeStruct((M_p, d_model_p), orig_dtype),
        grid_spec=pltpu.PrefetchScalarGridSpec(
            num_scalar_prefetch=0,
            grid=grid,
            in_specs=[
                pl.BlockSpec((tm, d_model_p), lambda i, k: (i, 0)),   # x rows
                pl.BlockSpec((d_model_p, tf), lambda i, k: (0, k)),   # W1 chunk
                pl.BlockSpec((1, tf), lambda i, k: (0, k)),           # b1 chunk
                pl.BlockSpec((tf, d_model_p), lambda i, k: (k, 0)),   # W2 chunk
                pl.BlockSpec((1, d_model_p), lambda i, k: (0, 0)),    # b2
            ],
            out_specs=pl.BlockSpec((tm, d_model_p), lambda i, k: (i, 0)),
            scratch_shapes=scratch_shapes,
        ),
        compiler_params=pltpu.CompilerParams(
            dimension_semantics=("parallel", "arbitrary"),
            vmem_limit_bytes=vmem_limit,
        ),
        cost_estimate=cost,
    )(xp, w1p, b1p, w2p, b2p)

    return out_p[:M, :d_model].reshape(batch, seq, d_model)


def make_feed_forward_block(w1, b1, w2, b2, *, dropout: float = 0.0,
                            compute_dtype=jnp.bfloat16, tm=512, tf=None):
    """Build a callable equivalent to FeedForwardBlock.forward (eval mode).

    w1: [d_model, d_ff], b1: [d_ff], w2: [d_ff, d_model], b2: [d_model].
    Weight padding / casting is done once here (not per call).
    compute_dtype: matmul operand dtype (bf16 recommended for full MXU rate;
    float32 for exact parity with the f32 PyTorch reference).
    """
    del dropout  # TODO(synk): eval-mode identity; training would need PRNG mask.
    d_model, d_ff = int(w1.shape[0]), int(w1.shape[1])
    assert w2.shape == (d_ff, d_model)

    itemsize = jnp.dtype(compute_dtype).itemsize
    vmem_cap = _vmem_capacity_bytes()
    budget = vmem_cap - (16 << 20)

    # Lane alignment: 256 keeps the 256-wide MXU (v6e/v7x) full-width; fall
    # back to 128 for tiny dims so padding doesn't double the footprint.
    feat_align = 256 if d_model > 128 else 128
    ff_align = 256 if d_ff > 128 else 128
    d_model_p = _round_up(d_model, feat_align)
    d_ff_p0 = _round_up(d_ff, ff_align)

    tm_pref = max(128, _round_up(tm, 128))

    # d_ff chunk size: prefer whole-d_ff residency (W1/W2 DMA'd once for the
    # entire grid), else the largest chunk that fits the chip's VMEM budget.
    if tf is None:
        candidates = [d_ff_p0] + [c for c in (4096, 2048, 1024, 512, 256, 128)
                                  if c < d_ff_p0]
        tf = candidates[-1]
        for cand in candidates:
            nk_c = pl.cdiv(d_ff_p0, cand)
            if _tile_vmem_bytes(tm_pref, cand, d_model_p, nk_c,
                                itemsize, 4) <= budget:
                tf = cand
                break
    tf = max(128, _round_up(int(tf), 128))
    d_ff_p = _round_up(d_ff_p0, tf)

    # One-time weight padding + cast (hoisted out of the per-call jitted path).
    w1p = jnp.pad(w1.astype(compute_dtype),
                  ((0, d_model_p - d_model), (0, d_ff_p - d_ff)))
    w2p = jnp.pad(w2.astype(compute_dtype),
                  ((0, d_ff_p - d_ff), (0, d_model_p - d_model)))
    b1p = jnp.pad(b1.astype(jnp.float32).reshape(1, d_ff),
                  ((0, 0), (0, d_ff_p - d_ff)))
    b2p = jnp.pad(b2.astype(jnp.float32).reshape(1, d_model),
                  ((0, 0), (0, d_model_p - d_model)))

    def apply(x):
        return _ffn_forward(
            x, w1p, b1p, w2p, b2p,
            d_model=d_model, d_model_p=d_model_p, d_ff_p=d_ff_p, tf=tf,
            tm_pref=tm_pref, vmem_cap=vmem_cap, compute_dtype=compute_dtype)

    return apply


def _reference(x, w1, b1, w2, b2):
    h = jnp.maximum(x @ w1 + b1, 0.0)
    return jax.nn.sigmoid(h @ w2 + b2)


if __name__ == "__main__":
    # Small shapes consistent with the module: [batch, seq, d_model] tokens.
    batch, seq, d_model, d_ff = 2, 8, 32, 64

    key = jax.random.PRNGKey(0)
    kx, k1, k2, k3, k4 = jax.random.split(key, 5)

    x = jax.random.normal(kx, (batch, seq, d_model), dtype=jnp.float32)

    # Deterministic parameter init (uniform, roughly nn.Linear scale).
    bound1 = 1.0 / (d_model ** 0.5)
    bound2 = 1.0 / (d_ff ** 0.5)
    w1 = jax.random.uniform(k1, (d_model, d_ff), jnp.float32, -bound1, bound1)
    b1 = jax.random.uniform(k2, (d_ff,), jnp.float32, -bound1, bound1)
    w2 = jax.random.uniform(k3, (d_ff, d_model), jnp.float32, -bound2, bound2)
    b2 = jax.random.uniform(k4, (d_model,), jnp.float32, -bound2, bound2)

    ref = _reference(x, w1, b1, w2, b2)

    # f32-operand instance: exact parity with the eval-mode PyTorch module.
    ffn_f32 = make_feed_forward_block(w1, b1, w2, b2, dropout=0.1,
                                      compute_dtype=jnp.float32)
    out = jax.block_until_ready(ffn_f32(x))
    assert out.shape == (batch, seq, d_model)
    assert jnp.allclose(out, ref, atol=1e-5, rtol=1e-5), "f32 mismatch vs reference"

    # bf16-operand instance (recommended production path; f32 accumulation).
    ffn_bf16 = make_feed_forward_block(w1, b1, w2, b2, dropout=0.1,
                                       compute_dtype=jnp.bfloat16)
    out_bf16 = jax.block_until_ready(ffn_bf16(x))
    assert jnp.allclose(out_bf16, ref, atol=2e-2, rtol=2e-2), \
        "bf16 mismatch vs reference"

    # Also exercise the multi-chunk reduction kernel (tf < d_ff -> accumulator).
    d_ff2 = 256
    w1b = jax.random.uniform(k1, (d_model, d_ff2), jnp.float32, -bound1, bound1)
    b1b = jax.random.uniform(k2, (d_ff2,), jnp.float32, -bound1, bound1)
    w2b = jax.random.uniform(k3, (d_ff2, d_model), jnp.float32, -bound2, bound2)
    ref2 = _reference(x, w1b, b1b, w2b, b2)
    ffn_multi = make_feed_forward_block(w1b, b1b, w2b, b2,
                                        compute_dtype=jnp.float32, tf=128)
    out2 = jax.block_until_ready(ffn_multi(x))
    assert jnp.allclose(out2, ref2, atol=1e-4, rtol=1e-4), \
        "multi-chunk mismatch vs reference"

    print("KERNEL_OK")
</pallas_src>

<mosaic_0001>
module attributes {stable_mosaic.version = 11 : i64} {
  func.func @_ffn_kernel_single(%arg0: i32, %arg1: i32, %arg2: memref<16x128xf32, #tpu.memory_space<vmem>>, %arg3: memref<128x128xf32, #tpu.memory_space<vmem>>, %arg4: memref<1x128xf32, #tpu.memory_space<vmem>>, %arg5: memref<128x128xf32, #tpu.memory_space<vmem>>, %arg6: memref<1x128xf32, #tpu.memory_space<vmem>>, %arg7: memref<16x128xf32, #tpu.memory_space<vmem>>) attributes {dimension_semantics = [#tpu.dimension_semantics<parallel>, #tpu.dimension_semantics<arbitrary>], iteration_bounds = array<i64: 1, 1>, scalar_prefetch = 0 : i64, scratch_operands = 0 : i64, tpu.core_type = #tpu.core_type<tc>, window_params = [{transform_indices = @transform_0, window_bounds = array<i64: 16, 128>}, {transform_indices = @transform_1, window_bounds = array<i64: 128, 128>}, {transform_indices = @transform_2, window_bounds = array<i64: 1, 128>}, {transform_indices = @transform_3, window_bounds = array<i64: 128, 128>}, {pipeline_mode = #tpu.pipeline_mode<synchronous>, transform_indices = @transform_4, window_bounds = array<i64: 1, 128>}, {transform_indices = @transform_5, window_bounds = array<i64: 16, 128>}]} {
    %c0 = arith.constant 0 : index
    %c0_0 = arith.constant 0 : index
    %0 = vector.load %arg2[%c0, %c0_0] : memref<16x128xf32, #tpu.memory_space<vmem>>, vector<16x128xf32>
    %c0_1 = arith.constant 0 : index
    %c0_2 = arith.constant 0 : index
    %1 = vector.load %arg3[%c0_1, %c0_2] : memref<128x128xf32, #tpu.memory_space<vmem>>, vector<128x128xf32>
    %cst = arith.constant dense<0.000000e+00> : vector<16x128xf32>
    %2 = tpu.matmul %0, %1, %cst {dimension_numbers = #tpu.dot_dimension_numbers<[1], [0], [0], [1], [0, 0, 1, 1], [], []>} : vector<16x128xf32>, vector<128x128xf32>, vector<16x128xf32> -> vector<16x128xf32>
    %c0_3 = arith.constant 0 : index
    %c0_4 = arith.constant 0 : index
    %3 = vector.load %arg4[%c0_3, %c0_4] : memref<1x128xf32, #tpu.memory_space<vmem>>, vector<1x128xf32>
    %4 = vector.broadcast %3 : vector<1x128xf32> to vector<16x128xf32>
    %5 = arith.addf %2, %4 : vector<16x128xf32>
    %cst_5 = arith.constant 0.000000e+00 : f32
    %6 = vector.broadcast %cst_5 : f32 to vector<16x128xf32>
    %7 = arith.maximumf %5, %6 : vector<16x128xf32>
    %c0_6 = arith.constant 0 : index
    %c0_7 = arith.constant 0 : index
    %8 = vector.load %arg5[%c0_6, %c0_7] : memref<128x128xf32, #tpu.memory_space<vmem>>, vector<128x128xf32>
    %cst_8 = arith.constant dense<0.000000e+00> : vector<16x128xf32>
    %9 = tpu.matmul %7, %8, %cst_8 {dimension_numbers = #tpu.dot_dimension_numbers<[1], [0], [0], [1], [0, 0, 1, 1], [], []>} : vector<16x128xf32>, vector<128x128xf32>, vector<16x128xf32> -> vector<16x128xf32>
    %c0_9 = arith.constant 0 : index
    %c0_10 = arith.constant 0 : index
    %10 = vector.load %arg6[%c0_9, %c0_10] : memref<1x128xf32, #tpu.memory_space<vmem>>, vector<1x128xf32>
    %11 = vector.broadcast %10 : vector<1x128xf32> to vector<16x128xf32>
    %12 = arith.addf %9, %11 : vector<16x128xf32>
    %13 = arith.negf %12 : vector<16x128xf32>
    %14 = math.exp %13 : vector<16x128xf32>
    %cst_11 = arith.constant 1.000000e+00 : f32
    %15 = vector.broadcast %cst_11 : f32 to vector<16x128xf32>
    %16 = arith.addf %15, %14 : vector<16x128xf32>
    %17 = arith.divf %15, %16 : vector<16x128xf32>
    %c0_12 = arith.constant 0 : index
    %c0_13 = arith.constant 0 : index
    %18 = vector.load %arg7[%c0_12, %c0_13] : memref<16x128xf32, #tpu.memory_space<vmem>>, vector<16x128xf32>
    tpu.vector_store %arg7[%c0_12, %c0_13], %17 {strides = array<i32>} : memref<16x128xf32, #tpu.memory_space<vmem>>, vector<16x128xf32>,
    return
  }
  func.func @transform_0(%arg0: i32, %arg1: i32) -> (i32, i32) {
    %c0_i32 = arith.constant 0 : i32
    %c0_i32_0 = arith.constant 0 : i32
    return %arg0, %c0_i32 : i32, i32
  }
  func.func @transform_1(%arg0: i32, %arg1: i32) -> (i32, i32) {
    %c0_i32 = arith.constant 0 : i32
    %c0_i32_0 = arith.constant 0 : i32
    return %c0_i32, %arg1 : i32, i32
  }
  func.func @transform_2(%arg0: i32, %arg1: i32) -> (i32, i32) {
    %c0_i32 = arith.constant 0 : i32
    %c0_i32_0 = arith.constant 0 : i32
    return %c0_i32, %arg1 : i32, i32
  }
  func.func @transform_3(%arg0: i32, %arg1: i32) -> (i32, i32) {
    %c0_i32 = arith.constant 0 : i32
    %c0_i32_0 = arith.constant 0 : i32
    return %arg1, %c0_i32 : i32, i32
  }
  func.func @transform_4(%arg0: i32, %arg1: i32) -> (i32, i32) {
    %c0_i32 = arith.constant 0 : i32
    %c0_i32_0 = arith.constant 0 : i32
    %c0_i32_1 = arith.constant 0 : i32
    return %c0_i32, %c0_i32_0 : i32, i32
  }
  func.func @transform_5(%arg0: i32, %arg1: i32) -> (i32, i32) {
    %c0_i32 = arith.constant 0 : i32
    %c0_i32_0 = arith.constant 0 : i32
    return %arg0, %c0_i32 : i32, i32
  }
}

</mosaic_0001>

<llo_original>
// kernel: _ffn_forward.1
$region0: #{_ffn_forward.1}
  #allocation0 [shape = 'u32[]', space=smem, size = 0x4, offset = 0x4, fixed_abs, tag = 'smem constant byte address 0x4 - core index']
  #allocation1 [shape = 'u32[144,128]{1,0:T(1,128)}', space=vmem, size = 0x12000, scoped, tag = 'internal scratch']
  %s0 = inlined_call_operand.vmem [shape: f32[16,128], index: 0, kind: input, shape index: {}]
  %s1 = inlined_call_operand.hbm [shape: f32[128,128], index: 1, kind: input, shape index: {}]
  %s2 = inlined_call_operand.vmem [shape: f32[1,128], index: 2, kind: input, shape index: {}]
  %s3 = inlined_call_operand.hbm [shape: f32[128,128], index: 3, kind: input, shape index: {}]
  %s4 = inlined_call_operand.vmem [shape: f32[1,128], index: 4, kind: input, shape index: {}]
  %s5 = inlined_call_operand.vmem [shape: f32[16,128], index: 5, kind: output, shape index: {}]
  %s6 = sld [smem:[#allocation0]]
  $region38: #{_ffn_forward.1} parent=0
    _
  %s8 = ssub.s32 1, %s6
  %s9 = scalar_select 0, %s8, %s6
  $region1: #{_ffn_forward.1} parent=0
    #allocation2 [shape = 'u8[65536]{0}', space=vmem, size = 0x10000, scoped, tag = 'input window, operand 1, single buffered']
    #allocation3 [shape = 's32[1]{0}', space=sflag, size = 0x4, scoped, tag = 'scoped memory for _ffn_forward.1']
    #allocation4 [shape = 'u8[65536]{0}', space=vmem, size = 0x10000, scoped, tag = 'input window, operand 3, single buffered']
    #allocation5 [shape = 's32[1]{0}', space=sflag, size = 0x4, scoped, tag = 'scoped memory for _ffn_forward.1']
    %10 = vsyncpa [#allocation3], 0
    %11 = vsyncpa [#allocation5], 0
    // Predicated region
    $region2: #{_ffn_forward.1} parent=1 // pred_check
      _
    $region3: #{_ffn_forward.1} parent=1 // pred_check_branch
      %13 = sbr.rel (0) target = $region5
    $region4: #{_ffn_forward.1} parent=1 // pred_region
      _
    $region5: #{_ffn_forward.1} parent=1 // pred_fallthru
      _
    // Predicated region
    $region6: #{_ffn_forward.1} parent=1 // pred_check
      _
    $region7: #{_ffn_forward.1} parent=1 // pred_check_branch
      %15 = sbr.rel (0) target = $region9
    $region8: #{_ffn_forward.1} parent=1 // pred_region
      %s17 = ssub.s32 2048, 2048
      %18 = vsyncadd [#allocation3], %s17
      %s19 = sshll.u32 [#allocation2], 4
      %s20 = int_to_ptr.vmem [resolvable:$true] %s19
      %25 = dma.hbm_to_vmem [thread:$0]  %s1, 2048, %s20, [#allocation3], 128, 128, 8
    $region9: #{_ffn_forward.1} parent=1 // pred_fallthru
      _
    // Predicated region
    $region10: #{_ffn_forward.1} parent=1 // pred_check
      _
    $region11: #{_ffn_forward.1} parent=1 // pred_check_branch
      %27 = sbr.rel (0) target = $region13
    $region12: #{_ffn_forward.1} parent=1 // pred_region
      _
    $region13: #{_ffn_forward.1} parent=1 // pred_fallthru
      _
    // Predicated region
    $region14: #{_ffn_forward.1} parent=1 // pred_check
      _
    $region15: #{_ffn_forward.1} parent=1 // pred_check_branch
      %29 = sbr.rel (0) target = $region17
    $region16: #{_ffn_forward.1} parent=1 // pred_region
      %s31 = ssub.s32 2048, 2048
      %32 = vsyncadd [#allocation5], %s31
      %s33 = sshll.u32 [#allocation4], 4
      %s34 = int_to_ptr.vmem [resolvable:$true] %s33
      %39 = dma.hbm_to_vmem [thread:$0]  %s3, 2048, %s34, [#allocation5], 128, 128, 8
    $region17: #{_ffn_forward.1} parent=1 // pred_fallthru
      _
    // Predicated region
    $region18: #{_ffn_forward.1} parent=1 // pred_check
      _
    $region19: #{_ffn_forward.1} parent=1 // pred_check_branch
      %41 = sbr.rel (0) target = $region21
    $region20: #{_ffn_forward.1} parent=1 // pred_region
      _
    $region21: #{_ffn_forward.1} parent=1 // pred_fallthru
      _
    // Predicated region
    $region22: #{_ffn_forward.1} parent=1 // pred_check
      _
    $region23: #{_ffn_forward.1} parent=1 // pred_check_branch
      %43 = sbr.rel (0) target = $region25
    $region24: #{_ffn_forward.1} parent=1 // pred_region
      %44 = dma.done [#allocation3], 2048
    $region25: #{_ffn_forward.1} parent=1 // pred_fallthru
      _
    // Predicated region
    $region26: #{_ffn_forward.1} parent=1 // pred_check
      _
    $region27: #{_ffn_forward.1} parent=1 // pred_check_branch
      %46 = sbr.rel (0) target = $region29
    $region28: #{_ffn_forward.1} parent=1 // pred_region
      %47 = dma.done [#allocation5], 2048
    $region29: #{_ffn_forward.1} parent=1 // pred_fallthru
      _
    %v48 = vld [vmem:[%s0] sm:$0xff]
    %v49 = vld [vmem:[%s0 + $0x8] sm:$0xff]
    %v50 = vld [vmem:[#allocation2] sm:$0xff]
    %v51 = vld [vmem:[#allocation2 + $0x8] sm:$0xff]
    %v52 = vld [vmem:[#allocation2 + $0x10] sm:$0xff]
    %v53 = vld [vmem:[#allocation2 + $0x18] sm:$0xff]
    %v54 = vld [vmem:[#allocation2 + $0x20] sm:$0xff]
    %v55 = vld [vmem:[#allocation2 + $0x28] sm:$0xff]
    %v56 = vld [vmem:[#allocation2 + $0x30] sm:$0xff]
    %v57 = vld [vmem:[#allocation2 + $0x38] sm:$0xff]
    %v58 = vld [vmem:[#allocation2 + $0x40] sm:$0xff]
    %v59 = vld [vmem:[#allocation2 + $0x48] sm:$0xff]
    %v60 = vld [vmem:[#allocation2 + $0x50] sm:$0xff]
    %v61 = vld [vmem:[#allocation2 + $0x58] sm:$0xff]
    %v62 = vld [vmem:[#allocation2 + $0x60] sm:$0xff]
    %v63 = vld [vmem:[#allocation2 + $0x68] sm:$0xff]
    %v64 = vld [vmem:[#allocation2 + $0x70] sm:$0xff]
    %v65 = vld [vmem:[#allocation2 + $0x78] sm:$0xff]
    %v66 = vld [vmem:[%s2] sm:$0x1]
    %v68 = vlaneseq
    %v69 = vshrl.u32 %v68, 7
    %v70 = vsub.s32 0, %v69
    %v71 = vrot.slane %v66, %v70
    %73 = vmatprep.subr.mxu0 0.0
    %74 = vmatpush1.msra.mxu0 %v65
    %75 = vmatprep.subr.mxu0 0.0
    %76 = vmatpush1.msra.mxu0 %v64
    %77 = vmatprep.subr.mxu0 0.0
    %78 = vmatpush1.msra.mxu0 %v63
    %79 = vmatprep.subr.mxu0 0.0
    %80 = vmatpush1.msra.mxu0 %v62
    %81 = vmatprep.subr.mxu0 0.0
    %82 = vmatpush1.msra.mxu0 %v61
    %83 = vmatprep.subr.mxu0 0.0
    %84 = vmatpush1.msra.mxu0 %v60
    %85 = vmatprep.subr.mxu0 0.0
    %86 = vmatpush1.msra.mxu0 %v59
    %87 = vmatprep.subr.mxu0 0.0
    %88 = vmatpush1.msra.mxu0 %v58
    %89 = vmatprep.subr.mxu0 0.0
    %90 = vmatpush1.msra.mxu0 %v57
    %91 = vmatprep.subr.mxu0 0.0
    %92 = vmatpush1.msra.mxu0 %v56
    %93 = vmatprep.subr.mxu0 0.0
    %94 = vmatpush1.msra.mxu0 %v55
    %95 = vmatprep.subr.mxu0 0.0
    %96 = vmatpush1.msra.mxu0 %v54
    %97 = vmatprep.subr.mxu0 0.0
    %98 = vmatpush1.msra.mxu0 %v53
    %99 = vmatprep.subr.mxu0 0.0
    %100 = vmatpush1.msra.mxu0 %v52
    %101 = vmatprep.subr.mxu0 0.0
    %102 = vmatpush1.msra.mxu0 %v51
    %103 = vmatprep.subr.mxu0 0.0
    %104 = vmatpush1.msra.mxu0 %v50
    %105 = vmatprep.subr.mxu0 0.0
    %106 = vmatpush2.msra.mxu0 0.0
    %107 = vmatprep.subr.mxu0 0.0
    %108 = vmatpush2.msra.mxu0 0.0
    %109 = vmatprep.subr.mxu0 0.0
    %110 = vmatpush2.msra.mxu0 0.0
    %111 = vmatprep.subr.mxu0 0.0
    %112 = vmatpush2.msra.mxu0 0.0
    %113 = vmatprep.subr.mxu0 0.0
    %114 = vmatpush2.msra.mxu0 0.0
    %115 = vmatprep.subr.mxu0 0.0
    %116 = vmatpush2.msra.mxu0 0.0
    %117 = vmatprep.subr.mxu0 0.0
    %118 = vmatpush2.msra.mxu0 0.0
    %119 = vmatprep.subr.mxu0 0.0
    %120 = vmatpush2.msra.mxu0 0.0
    %121 = vmatprep.subr.mxu0 0.0
    %122 = vmatpush2.msra.mxu0 0.0
    %123 = vmatprep.subr.mxu0 0.0
    %124 = vmatpush2.msra.mxu0 0.0
    %125 = vmatprep.subr.mxu0 0.0
    %126 = vmatpush2.msra.mxu0 0.0
    %127 = vmatprep.subr.mxu0 0.0
    %128 = vmatpush2.msra.mxu0 0.0
    %129 = vmatprep.subr.mxu0 0.0
    %130 = vmatpush2.msra.mxu0 0.0
    %131 = vmatprep.subr.mxu0 0.0
    %132 = vmatpush2.msra.mxu0 0.0
    %133 = vmatprep.subr.mxu0 0.0
    %134 = vmatpush2.msra.mxu0 0.0
    %135 = vmatprep.subr.mxu0 0.0
    %136 = vmatpush2.msra.mxu0 0.0
    %137 = vmatprep.mubr.f32.mxu0 0.0
    %138 = vmatmul.mubr.f32.gmra.mxu0 %v48
    %v139 = vpop.f32.mrf.mxu0
    %v140 = vadd.f32 %v71, %v139
    %v141 = vpop.f32.mrf.mxu0
    %142 = vmatprep.mubr.f32.mxu0 0.0
    %143 = vmatmul.mubr.f32.gmra.mxu0 %v49
    %v144 = vpop.f32.mrf.mxu0
    %v145 = vadd.f32 %v71, %v144
    %v146 = vpop.f32.mrf.mxu0
    %147 = vdwg.mxu0
    %v148 = vmax.f32 %v140, 0.0
    %v149 = vmax.f32 %v145, 0.0
    %v150 = vld [vmem:[#allocation4] sm:$0xff]
    %v151 = vld [vmem:[#allocation4 + $0x8] sm:$0xff]
    %v152 = vld [vmem:[#allocation4 + $0x10] sm:$0xff]
    %v153 = vld [vmem:[#allocation4 + $0x18] sm:$0xff]
    %v154 = vld [vmem:[#allocation4 + $0x20] sm:$0xff]
    %v155 = vld [vmem:[#allocation4 + $0x28] sm:$0xff]
    %v156 = vld [vmem:[#allocation4 + $0x30] sm:$0xff]
    %v157 = vld [vmem:[#allocation4 + $0x38] sm:$0xff]
    %v158 = vld [vmem:[#allocation4 + $0x40] sm:$0xff]
    %v159 = vld [vmem:[#allocation4 + $0x48] sm:$0xff]
    %v160 = vld [vmem:[#allocation4 + $0x50] sm:$0xff]
    %v161 = vld [vmem:[#allocation4 + $0x58] sm:$0xff]
    %v162 = vld [vmem:[#allocation4 + $0x60] sm:$0xff]
    %v163 = vld [vmem:[#allocation4 + $0x68] sm:$0xff]
    %v164 = vld [vmem:[#allocation4 + $0x70] sm:$0xff]
    %v165 = vld [vmem:[#allocation4 + $0x78] sm:$0xff]
    %v166 = vld [vmem:[%s4] sm:$0x1]
    %v168 = vlaneseq
    %v169 = vshrl.u32 %v168, 7
    %v170 = vsub.s32 0, %v169
    %v171 = vrot.slane %v166, %v170
    %173 = vmatprep.subr.mxu0 0.0
    %174 = vmatpush1.msra.mxu0 %v165
    %175 = vmatprep.subr.mxu0 0.0
    %176 = vmatpush1.msra.mxu0 %v164
    %177 = vmatprep.subr.mxu0 0.0
    %178 = vmatpush1.msra.mxu0 %v163
    %179 = vmatprep.subr.mxu0 0.0
    %180 = vmatpush1.msra.mxu0 %v162
    %181 = vmatprep.subr.mxu0 0.0
    %182 = vmatpush1.msra.mxu0 %v161
    %183 = vmatprep.subr.mxu0 0.0
    %184 = vmatpush1.msra.mxu0 %v160
    %185 = vmatprep.subr.mxu0 0.0
    %186 = vmatpush1.msra.mxu0 %v159
    %187 = vmatprep.subr.mxu0 0.0
    %188 = vmatpush1.msra.mxu0 %v158
    %189 = vmatprep.subr.mxu0 0.0
    %190 = vmatpush1.msra.mxu0 %v157
    %191 = vmatprep.subr.mxu0 0.0
    %192 = vmatpush1.msra.mxu0 %v156
    %193 = vmatprep.subr.mxu0 0.0
    %194 = vmatpush1.msra.mxu0 %v155
    %195 = vmatprep.subr.mxu0 0.0
    %196 = vmatpush1.msra.mxu0 %v154
    %197 = vmatprep.subr.mxu0 0.0
    %198 = vmatpush1.msra.mxu0 %v153
    %199 = vmatprep.subr.mxu0 0.0
    %200 = vmatpush1.msra.mxu0 %v152
    %201 = vmatprep.subr.mxu0 0.0
    %202 = vmatpush1.msra.mxu0 %v151
    %203 = vmatprep.subr.mxu0 0.0
    %204 = vmatpush1.msra.mxu0 %v150
    %205 = vmatprep.subr.mxu0 0.0
    %206 = vmatpush2.msra.mxu0 0.0
    %207 = vmatprep.subr.mxu0 0.0
    %208 = vmatpush2.msra.mxu0 0.0
    %209 = vmatprep.subr.mxu0 0.0
    %210 = vmatpush2.msra.mxu0 0.0
    %211 = vmatprep.subr.mxu0 0.0
    %212 = vmatpush2.msra.mxu0 0.0
    %213 = vmatprep.subr.mxu0 0.0
    %214 = vmatpush2.msra.mxu0 0.0
    %215 = vmatprep.subr.mxu0 0.0
    %216 = vmatpush2.msra.mxu0 0.0
    %217 = vmatprep.subr.mxu0 0.0
    %218 = vmatpush2.msra.mxu0 0.0
    %219 = vmatprep.subr.mxu0 0.0
    %220 = vmatpush2.msra.mxu0 0.0
    %221 = vmatprep.subr.mxu0 0.0
    %222 = vmatpush2.msra.mxu0 0.0
    %223 = vmatprep.subr.mxu0 0.0
    %224 = vmatpush2.msra.mxu0 0.0
    %225 = vmatprep.subr.mxu0 0.0
    %226 = vmatpush2.msra.mxu0 0.0
    %227 = vmatprep.subr.mxu0 0.0
    %228 = vmatpush2.msra.mxu0 0.0
    %229 = vmatprep.subr.mxu0 0.0
    %230 = vmatpush2.msra.mxu0 0.0
    %231 = vmatprep.subr.mxu0 0.0
    %232 = vmatpush2.msra.mxu0 0.0
    %233 = vmatprep.subr.mxu0 0.0
    %234 = vmatpush2.msra.mxu0 0.0
    %235 = vmatprep.subr.mxu0 0.0
    %236 = vmatpush2.msra.mxu0 0.0
    %237 = vmatprep.mubr.f32.mxu0 0.0
    %238 = vmatmul.mubr.f32.gmra.mxu0 %v148
    %v239 = vpop.f32.mrf.mxu0
    %v240 = vadd.f32 %v171, %v239
    %v241 = vpop.f32.mrf.mxu0
    %242 = vmatprep.mubr.f32.mxu0 0.0
    %243 = vmatmul.mubr.f32.gmra.mxu0 %v149
    %v244 = vpop.f32.mrf.mxu0
    %v245 = vadd.f32 %v171, %v244
    %v246 = vpop.f32.mrf.mxu0
    %247 = vdwg.mxu0
    %v248 = vxor.u32 %v240, 2147483648
    %v249 = vxor.u32 %v245, 2147483648
    %v250 = vmul.f32 %v248, 1.442695
    %v251 = vpow.pop %v250
    %v252 = vmul.f32 %v249, 1.442695
    %v253 = vpow.pop %v252
    %v254 = vadd.f32 %v251, 1.0
    %v255 = vadd.f32 %v253, 1.0
    %v256 = vrcp.pop %v254
    %v257 = vmul.f32 1.0, %v256
    %v258 = vrcp.pop %v255
    %v259 = vmul.f32 1.0, %v258
    %260 = vst [vmem:[%s5] sm:$0xff] %v257
    %261 = vst [vmem:[%s5 + $0x8] sm:$0xff] %v259
    // Predicated region
    $region30: #{_ffn_forward.1} parent=1 // pred_check
      _
    $region31: #{_ffn_forward.1} parent=1 // pred_check_branch
      %263 = sbr.rel (0) target = $region33
    $region32: #{_ffn_forward.1} parent=1 // pred_region
      _
    $region33: #{_ffn_forward.1} parent=1 // pred_fallthru
      _
    // Predicated region
    $region34: #{_ffn_forward.1} parent=1 // pred_check
      _
    $region35: #{_ffn_forward.1} parent=1 // pred_check_branch
      %265 = sbr.rel (0) target = $region37
    $region36: #{_ffn_forward.1} parent=1 // pred_region
      _
    $region37: #{_ffn_forward.1} parent=1 // pred_fallthru
      _
    %266 = vsyncpa [#allocation3], 1
    %267 = vsyncpa [#allocation5], 1

</llo_original>
